<compile_context>
chip_gen: v6e
topology: v6e:2x2x1
jax: 0.10.0
libtpu: 0.0.40
codegen_flags: <defaults>
</compile_context>

<pallas_src>
import numpy as np
import jax
import jax.numpy as jnp
from jax.experimental import pallas as pl
from jax.experimental.pallas import tpu as pltpu

IGNORE_INDEX = 255


def _round_up(x, m):
    return ((x + m - 1) // m) * m


def _pick_tile(total, max_tile=2048):
    """Largest multiple-of-128 divisor of `total` (itself a multiple of 128)
    that does not exceed max_tile."""
    best = 128
    d = total // 128
    for m in range(1, d + 1):
        if d % m == 0 and 128 * m <= max_tile:
            best = 128 * m
    return best


# --------------------------- kernel 1: softmax + errors ----------------------
def _softmax_errors_kernel(logits_ref, labels_ref, nerr_ref, fg_ref, gts_ref):
    """One (batch, pixel-tile) block: softmax over classes, negative Lovasz
    errors (zeroed on ignored/padded pixels), bf16 fg mask, accumulated gts."""
    x = logits_ref[0].astype(jnp.float32)                 # (C, T)
    m = jnp.max(x, axis=0, keepdims=True)
    e = jnp.exp(x - m)
    p = e / jnp.sum(e, axis=0, keepdims=True)             # softmax over classes

    lab = labels_ref[0]                                   # (1, T) int32
    C, T = x.shape
    cls = jax.lax.broadcasted_iota(jnp.int32, (C, T), 0)
    fg = (lab == cls).astype(jnp.float32)                 # (C, T), 0 on ignored
    valid = lab != IGNORE_INDEX                           # (1, T)

    # Negative errors so a single ascending key/value sort gives descending
    # errors; ignored/padded pixels get 0 (the maximum) and sort to the tail,
    # contributing nothing to the Lovasz dot product.
    nerr_ref[...] = jnp.where(valid, -jnp.abs(fg - p), 0.0)
    fg_ref[...] = fg.astype(jnp.bfloat16)                 # 0/1 exact in bf16

    @pl.when(jnp.logical_and(pl.program_id(0) == 0, pl.program_id(1) == 0))
    def _():
        gts_ref[...] = jnp.zeros_like(gts_ref)

    gts_ref[...] += jnp.sum(fg, axis=1, keepdims=True)    # per-class fg count


# --------------------------- kernel 2: tiled Lovasz ---------------------------
def _lovasz_flat_kernel(gts_ref, nerr_ref, fg_ref, loss_ref, cumfg_c, jac_c):
    """Pixel-tiled Lovasz: running prefix sums carried across tiles, prefix sum
    within the tile via log-step XLU rolls, first difference via one roll."""
    k = pl.program_id(0)

    @pl.when(k == 0)
    def _():
        loss_ref[...] = jnp.zeros_like(loss_ref)
        cumfg_c[...] = jnp.zeros_like(cumfg_c)
        jac_c[...] = jnp.zeros_like(jac_c)

    err = -nerr_ref[...]                                  # (C, T) >= 0, sorted desc
    fg = fg_ref[...].astype(jnp.float32)                  # (C, T) matching order
    gts = gts_ref[...]                                    # (C, 1)
    C, T = err.shape

    col = jax.lax.broadcasted_iota(jnp.int32, (C, T), 1)

    # Inclusive prefix sum of fg along the lane axis (Hillis-Steele scan).
    cum = fg
    off = 1
    while off < T:
        shifted = pltpu.roll(cum, shift=off, axis=1)      # shifted[:, j] = cum[:, j-off]
        cum = cum + jnp.where(col >= off, shifted, 0.0)
        off *= 2
    cum_fg = cum + cumfg_c[...]                           # absolute inclusive prefix

    pos1 = (col + 1 + k * T).astype(jnp.float32)          # absolute 1-based index
    cum_bg = pos1 - cum_fg                                # cumsum(1 - fg)
    intersection = gts - cum_fg
    union = gts + cum_bg                                  # >= 1 everywhere
    jac = 1.0 - intersection / union                      # (C, T)

    # First difference: grad[:, j] = jac[:, j] - jac[:, j-1]; the tile boundary
    # uses the carried last-jac of the previous tile (0 before the very first
    # element, matching grad[:, 0] = jac[:, 0]).
    prev = pltpu.roll(jac, shift=1, axis=1)
    prev = jnp.where(col == 0, jac_c[...], prev)
    grad = jac - prev

    loss_ref[...] += jnp.sum(err * grad, axis=1, keepdims=True)

    cumfg_c[...] += jnp.sum(fg, axis=1, keepdims=True)
    jac_c[...] = jac[:, T - 1:T]


# ------------------------------- wrapper --------------------------------------
@jax.jit
def lovasz_softmax_loss(logits, labels):
    """logits: (B, C, H, W) float, labels: (B, H, W) int (ignore_index=255)."""
    B, C, H, W = logits.shape
    HW = H * W
    HWpad = _round_up(HW, 128)
    thw = _pick_tile(HWpad, 2048)          # divisor of HWpad, multiple of 128
    nhw = HWpad // thw
    Npad = B * HWpad

    # Free reshapes; transpose is fused into the kernel via the index_map.
    x3 = logits.reshape(B, C, HW)
    lab3 = labels.reshape(B, 1, HW).astype(jnp.int32)
    if HWpad != HW:
        pad = HWpad - HW
        x3 = jnp.pad(x3, ((0, 0), (0, 0), (0, pad)))
        lab3 = jnp.pad(lab3, ((0, 0), (0, 0), (0, pad)),
                       constant_values=IGNORE_INDEX)

    nerr, fg, gts = pl.pallas_call(
        _softmax_errors_kernel,
        out_shape=(
            jax.ShapeDtypeStruct((C, Npad), jnp.float32),   # negative errors
            jax.ShapeDtypeStruct((C, Npad), jnp.bfloat16),  # fg mask
            jax.ShapeDtypeStruct((C, 1), jnp.float32),      # per-class fg count
        ),
        grid=(B, nhw),
        in_specs=[
            pl.BlockSpec((1, C, thw), lambda b, i: (b, 0, i)),
            pl.BlockSpec((1, 1, thw), lambda b, i: (b, 0, i)),
        ],
        out_specs=(
            pl.BlockSpec((C, thw), lambda b, i: (0, b * nhw + i)),
            pl.BlockSpec((C, thw), lambda b, i: (0, b * nhw + i)),
            pl.BlockSpec((C, 1), lambda b, i: (0, 0)),
        ),
        compiler_params=pltpu.CompilerParams(
            dimension_semantics=("arbitrary", "arbitrary"),  # gts accumulates
            vmem_limit_bytes=32 * 1024 * 1024,
        ),
    )(x3, lab3)

    # TODO(synk): per-class descending sort has no clean Pallas TPU primitive;
    # done as a single key/value jax.lax.sort (ascending on negative errors).
    nerr_s, fg_s = jax.lax.sort((nerr, fg), dimension=1, num_keys=1,
                                is_stable=False)

    tk = _pick_tile(Npad, 2048)
    loss_c = pl.pallas_call(
        _lovasz_flat_kernel,
        out_shape=jax.ShapeDtypeStruct((C, 1), jnp.float32),
        grid=(Npad // tk,),
        in_specs=[
            pl.BlockSpec((C, 1), lambda k: (0, 0)),
            pl.BlockSpec((C, tk), lambda k: (0, k)),
            pl.BlockSpec((C, tk), lambda k: (0, k)),
        ],
        out_specs=pl.BlockSpec((C, 1), lambda k: (0, 0)),
        scratch_shapes=[
            pltpu.VMEM((C, 1), jnp.float32),   # running cum_fg prefix
            pltpu.VMEM((C, 1), jnp.float32),   # jac at previous tile's last pos
        ],
        compiler_params=pltpu.CompilerParams(
            dimension_semantics=("arbitrary",),
            vmem_limit_bytes=32 * 1024 * 1024,
        ),
    )(gts, nerr_s, fg_s)

    loss_c = loss_c[:, 0]
    present = (gts[:, 0] > 0).astype(jnp.float32)
    n_present = jnp.sum(present)
    # classes='present': mean over classes with at least one foreground pixel.
    return jnp.where(n_present > 0,
                     jnp.sum(loss_c * present) / jnp.maximum(n_present, 1.0),
                     jnp.float32(0.0))


# ---------------- pure-numpy reference (mirrors the PyTorch code) -------------
def _np_softmax(x, axis):
    m = x.max(axis=axis, keepdims=True)
    e = np.exp(x - m)
    return e / e.sum(axis=axis, keepdims=True)


def reference_lovasz_softmax(logits, labels, ignore=IGNORE_INDEX):
    probas = _np_softmax(logits.astype(np.float32), axis=1)
    B, C, H, W = probas.shape
    probas = np.transpose(probas, (0, 2, 3, 1)).reshape(-1, C)
    labels = labels.reshape(-1)
    valid = labels != ignore
    vp, vl = probas[valid], labels[valid]
    losses = []
    for c in range(C):
        fgc = (vl == c).astype(np.float64)
        if fgc.sum() == 0:
            continue
        errs = np.abs(fgc - vp[:, c].astype(np.float64))
        order = np.argsort(-errs, kind="stable")
        e_s, f_s = errs[order], fgc[order]
        gts = f_s.sum()
        inter = gts - np.cumsum(f_s)
        union = gts + np.cumsum(1.0 - f_s)
        jac = 1.0 - inter / union
        jac[1:] = jac[1:] - jac[:-1]
        losses.append(np.dot(e_s, jac))
    return float(np.mean(losses)) if losses else 0.0


if __name__ == "__main__":
    key = jax.random.PRNGKey(0)
    k1, k2, k3 = jax.random.split(key, 3)
    B, C, H, W = 2, 4, 16, 16
    logits = jax.random.normal(k1, (B, C, H, W), dtype=jnp.float32)
    labels = jax.random.randint(k2, (B, H, W), 0, C)
    ignore_mask = jax.random.uniform(k3, (B, H, W)) < 0.1
    labels = jnp.where(ignore_mask, IGNORE_INDEX, labels).astype(jnp.int32)

    loss = jax.block_until_ready(lovasz_softmax_loss(logits, labels))
    ref = reference_lovasz_softmax(np.asarray(logits), np.asarray(labels))
    assert abs(float(loss) - ref) < 1e-4, (float(loss), ref)
    print("KERNEL_OK")
</pallas_src>

<mosaic_0001>
module attributes {stable_mosaic.version = 11 : i64} {
  func.func @_softmax_errors_kernel(%arg0: i32, %arg1: i32, %arg2: memref<1x4x256xf32, #tpu.memory_space<vmem>>, %arg3: memref<1x1x256xi32, #tpu.memory_space<vmem>>, %arg4: memref<4x256xf32, #tpu.memory_space<vmem>>, %arg5: memref<4x256xbf16, #tpu.memory_space<vmem>>, %arg6: memref<4x1xf32, #tpu.memory_space<vmem>>) attributes {dimension_semantics = [#tpu.dimension_semantics<arbitrary>, #tpu.dimension_semantics<arbitrary>], iteration_bounds = array<i64: 2, 1>, scalar_prefetch = 0 : i64, scratch_operands = 0 : i64, tpu.core_type = #tpu.core_type<tc>, window_params = [{transform_indices = @transform_0, window_bounds = array<i64: 1, 4, 256>}, {transform_indices = @transform_1, window_bounds = array<i64: 1, 1, 256>}, {transform_indices = @transform_2, window_bounds = array<i64: 4, 256>}, {transform_indices = @transform_3, window_bounds = array<i64: 4, 256>}, {pipeline_mode = #tpu.pipeline_mode<synchronous>, transform_indices = @transform_4, window_bounds = array<i64: 4, 1>}]} {
    %c0 = arith.constant 0 : index
    %c0_0 = arith.constant 0 : index
    %c0_1 = arith.constant 0 : index
    %0 = vector.load %arg2[%c0, %c0_0, %c0_1] : memref<1x4x256xf32, #tpu.memory_space<vmem>>, vector<1x4x256xf32>
    %1 = vector.shape_cast %0 : vector<1x4x256xf32> to vector<4x256xf32>
    %cst = arith.constant dense<0xFF800000> : vector<256xf32>
    %2 = vector.multi_reduction <maximumf>, %1, %cst [0] : vector<4x256xf32> to vector<256xf32>
    %3 = vector.shape_cast %2 : vector<256xf32> to vector<1x256xf32>
    %4 = vector.broadcast %3 : vector<1x256xf32> to vector<4x256xf32>
    %5 = arith.subf %1, %4 : vector<4x256xf32>
    %6 = math.exp %5 : vector<4x256xf32>
    %cst_2 = arith.constant dense<0.000000e+00> : vector<256xf32>
    %7 = vector.multi_reduction <add>, %6, %cst_2 [0] : vector<4x256xf32> to vector<256xf32>
    %8 = vector.shape_cast %7 : vector<256xf32> to vector<1x256xf32>
    %9 = vector.broadcast %8 : vector<1x256xf32> to vector<4x256xf32>
    %10 = arith.divf %6, %9 : vector<4x256xf32>
    %c0_3 = arith.constant 0 : index
    %c0_4 = arith.constant 0 : index
    %c0_5 = arith.constant 0 : index
    %11 = vector.load %arg3[%c0_3, %c0_4, %c0_5] : memref<1x1x256xi32, #tpu.memory_space<vmem>>, vector<1x1x256xi32>
    %12 = vector.shape_cast %11 : vector<1x1x256xi32> to vector<1x256xi32>
    %13 = tpu.iota {dimensions = array<i32: 0>} : vector<4x256xi32>
    %14 = vector.broadcast %12 : vector<1x256xi32> to vector<4x256xi32>
    %15 = arith.cmpi eq, %14, %13 : vector<4x256xi32>
    %16 = arith.extui %15 : vector<4x256xi1> to vector<4x256xi32>
    %17 = arith.sitofp %16 : vector<4x256xi32> to vector<4x256xf32>
    %c255_i32 = arith.constant 255 : i32
    %18 = vector.broadcast %c255_i32 : i32 to vector<1x256xi32>
    %19 = arith.cmpi ne, %12, %18 : vector<1x256xi32>
    %20 = arith.subf %17, %10 : vector<4x256xf32>
    %21 = math.absf %20 : vector<4x256xf32>
    %cst_6 = arith.constant 0.000000e+00 : f32
    %22 = vector.broadcast %cst_6 : f32 to vector<4x256xf32>
    %23 = arith.subf %22, %21 : vector<4x256xf32>
    %cst_7 = arith.constant 0.000000e+00 : f32
    %24 = vector.shape_cast %19 : vector<1x256xi1> to vector<1x256xi1>
    %25 = vector.broadcast %24 : vector<1x256xi1> to vector<4x256xi1>
    %26 = vector.broadcast %cst_7 : f32 to vector<4x256xf32>
    %27 = arith.select %25, %23, %26 : vector<4x256xi1>, vector<4x256xf32>
    %c0_8 = arith.constant 0 : index
    %c0_9 = arith.constant 0 : index
    %28 = vector.load %arg4[%c0_8, %c0_9] : memref<4x256xf32, #tpu.memory_space<vmem>>, vector<4x256xf32>
    tpu.vector_store %arg4[%c0_8, %c0_9], %27 {strides = array<i32>} : memref<4x256xf32, #tpu.memory_space<vmem>>, vector<4x256xf32>,
    %29 = arith.truncf %17 : vector<4x256xf32> to vector<4x256xbf16>
    %c0_10 = arith.constant 0 : index
    %c0_11 = arith.constant 0 : index
    %30 = vector.load %arg5[%c0_10, %c0_11] : memref<4x256xbf16, #tpu.memory_space<vmem>>, vector<4x256xbf16>
    tpu.vector_store %arg5[%c0_10, %c0_11], %29 {strides = array<i32>} : memref<4x256xbf16, #tpu.memory_space<vmem>>, vector<4x256xbf16>,
    %c0_i32 = arith.constant 0 : i32
    %31 = arith.cmpi eq, %arg0, %c0_i32 : i32
    %c0_i32_12 = arith.constant 0 : i32
    %32 = arith.cmpi eq, %arg1, %c0_i32_12 : i32
    %33 = arith.andi %31, %32 : i1
    %34 = arith.extui %33 : i1 to i32
    %c0_i32_13 = arith.constant 0 : i32
    %35 = arith.cmpi ne, %34, %c0_i32_13 : i32
    scf.if %35 {
      %cst_19 = arith.constant 0.000000e+00 : f32
      %41 = vector.broadcast %cst_19 : f32 to vector<4x1xf32>
      %c0_20 = arith.constant 0 : index
      %c0_21 = arith.constant 0 : index
      %42 = vector.load %arg6[%c0_20, %c0_21] : memref<4x1xf32, #tpu.memory_space<vmem>>, vector<4x1xf32>
      tpu.vector_store %arg6[%c0_20, %c0_21], %41 {strides = array<i32>} : memref<4x1xf32, #tpu.memory_space<vmem>>, vector<4x1xf32>,
    } else {
    }
    %c0_14 = arith.constant 0 : index
    %c0_15 = arith.constant 0 : index
    %36 = vector.load %arg6[%c0_14, %c0_15] : memref<4x1xf32, #tpu.memory_space<vmem>>, vector<4x1xf32>
    %cst_16 = arith.constant dense<0.000000e+00> : vector<4xf32>
    %37 = vector.multi_reduction <add>, %17, %cst_16 [1] : vector<4x256xf32> to vector<4xf32>
    %38 = vector.shape_cast %37 : vector<4xf32> to vector<4x1xf32>
    %39 = arith.addf %36, %38 : vector<4x1xf32>
    %c0_17 = arith.constant 0 : index
    %c0_18 = arith.constant 0 : index
    %40 = vector.load %arg6[%c0_17, %c0_18] : memref<4x1xf32, #tpu.memory_space<vmem>>, vector<4x1xf32>
    tpu.vector_store %arg6[%c0_17, %c0_18], %39 {strides = array<i32>} : memref<4x1xf32, #tpu.memory_space<vmem>>, vector<4x1xf32>,
    return
  }
  func.func @transform_0(%arg0: i32, %arg1: i32) -> (i32, i32, i32) {
    %c0_i32 = arith.constant 0 : i32
    %c0_i32_0 = arith.constant 0 : i32
    return %arg0, %c0_i32, %arg1 : i32, i32, i32
  }
  func.func @transform_1(%arg0: i32, %arg1: i32) -> (i32, i32, i32) {
    %c0_i32 = arith.constant 0 : i32
    %c0_i32_0 = arith.constant 0 : i32
    return %arg0, %c0_i32, %arg1 : i32, i32, i32
  }
  func.func @transform_2(%arg0: i32, %arg1: i32) -> (i32, i32) {
    %c1_i32 = arith.constant 1 : i32
    %0 = arith.muli %arg0, %c1_i32 : i32
    %1 = arith.addi %0, %arg1 : i32
    %c0_i32 = arith.constant 0 : i32
    %c0_i32_0 = arith.constant 0 : i32
    return %c0_i32, %1 : i32, i32
  }
  func.func @transform_3(%arg0: i32, %arg1: i32) -> (i32, i32) {
    %c1_i32 = arith.constant 1 : i32
    %0 = arith.muli %arg0, %c1_i32 : i32
    %1 = arith.addi %0, %arg1 : i32
    %c0_i32 = arith.constant 0 : i32
    %c0_i32_0 = arith.constant 0 : i32
    return %c0_i32, %1 : i32, i32
  }
  func.func @transform_4(%arg0: i32, %arg1: i32) -> (i32, i32) {
    %c0_i32 = arith.constant 0 : i32
    %c0_i32_0 = arith.constant 0 : i32
    %c0_i32_1 = arith.constant 0 : i32
    return %c0_i32, %c0_i32_0 : i32, i32
  }
}

module attributes {stable_mosaic.version = 11 : i64} {
  func.func @_lovasz_flat_kernel(%arg0: i32, %arg1: memref<4x1xf32, #tpu.memory_space<vmem>>, %arg2: memref<4x512xf32, #tpu.memory_space<vmem>>, %arg3: memref<4x512xbf16, #tpu.memory_space<vmem>>, %arg4: memref<4x1xf32, #tpu.memory_space<vmem>>, %arg5: memref<4x1xf32, #tpu.memory_space<vmem>>, %arg6: memref<4x1xf32, #tpu.memory_space<vmem>>) attributes {dimension_semantics = [#tpu.dimension_semantics<arbitrary>], iteration_bounds = array<i64: 1>, scalar_prefetch = 0 : i64, scratch_operands = 2 : i64, tpu.core_type = #tpu.core_type<tc>, window_params = [{pipeline_mode = #tpu.pipeline_mode<synchronous>, transform_indices = @transform_0, window_bounds = array<i64: 4, 1>}, {transform_indices = @transform_1, window_bounds = array<i64: 4, 512>}, {transform_indices = @transform_2, window_bounds = array<i64: 4, 512>}, {pipeline_mode = #tpu.pipeline_mode<synchronous>, transform_indices = @transform_3, window_bounds = array<i64: 4, 1>}]} {
    %c0_i32 = arith.constant 0 : i32
    %0 = arith.cmpi eq, %arg0, %c0_i32 : i32
    %1 = arith.extui %0 : i1 to i32
    %c0_i32_0 = arith.constant 0 : i32
    %2 = arith.cmpi ne, %1, %c0_i32_0 : i32
    scf.if %2 {
      %cst_44 = arith.constant 0.000000e+00 : f32
      %102 = vector.broadcast %cst_44 : f32 to vector<4x1xf32>
      %c0_45 = arith.constant 0 : index
      %c0_46 = arith.constant 0 : index
      %103 = vector.load %arg4[%c0_45, %c0_46] : memref<4x1xf32, #tpu.memory_space<vmem>>, vector<4x1xf32>
      tpu.vector_store %arg4[%c0_45, %c0_46], %102 {strides = array<i32>} : memref<4x1xf32, #tpu.memory_space<vmem>>, vector<4x1xf32>,
      %cst_47 = arith.constant 0.000000e+00 : f32
      %104 = vector.broadcast %cst_47 : f32 to vector<4x1xf32>
      %c0_48 = arith.constant 0 : index
      %c0_49 = arith.constant 0 : index
      %105 = vector.load %arg5[%c0_48, %c0_49] : memref<4x1xf32, #tpu.memory_space<vmem>>, vector<4x1xf32>
      tpu.vector_store %arg5[%c0_48, %c0_49], %104 {strides = array<i32>} : memref<4x1xf32, #tpu.memory_space<vmem>>, vector<4x1xf32>,
      %cst_50 = arith.constant 0.000000e+00 : f32
      %106 = vector.broadcast %cst_50 : f32 to vector<4x1xf32>
      %c0_51 = arith.constant 0 : index
      %c0_52 = arith.constant 0 : index
      %107 = vector.load %arg6[%c0_51, %c0_52] : memref<4x1xf32, #tpu.memory_space<vmem>>, vector<4x1xf32>
      tpu.vector_store %arg6[%c0_51, %c0_52], %106 {strides = array<i32>} : memref<4x1xf32, #tpu.memory_space<vmem>>, vector<4x1xf32>,
    } else {
    }
    %c0 = arith.constant 0 : index
    %c0_1 = arith.constant 0 : index
    %3 = vector.load %arg2[%c0, %c0_1] : memref<4x512xf32, #tpu.memory_space<vmem>>, vector<4x512xf32>
    %cst = arith.constant 0.000000e+00 : f32
    %4 = vector.broadcast %cst : f32 to vector<4x512xf32>
    %5 = arith.subf %4, %3 : vector<4x512xf32>
    %c0_2 = arith.constant 0 : index
    %c0_3 = arith.constant 0 : index
    %6 = vector.load %arg3[%c0_2, %c0_3] : memref<4x512xbf16, #tpu.memory_space<vmem>>, vector<4x512xbf16>
    %7 = arith.extf %6 : vector<4x512xbf16> to vector<4x512xf32>
    %c0_4 = arith.constant 0 : index
    %c0_5 = arith.constant 0 : index
    %8 = vector.load %arg1[%c0_4, %c0_5] : memref<4x1xf32, #tpu.memory_space<vmem>>, vector<4x1xf32>
    %9 = tpu.iota {dimensions = array<i32: 1>} : vector<4x512xi32>
    %c1_i32 = arith.constant 1 : i32
    %10 = tpu.dynamic_rotate %7 by %c1_i32 dim 1 : vector<4x512xf32>, i32 -> vector<4x512xf32>
    %c1_i32_6 = arith.constant 1 : i32
    %11 = vector.broadcast %c1_i32_6 : i32 to vector<4x512xi32>
    %12 = arith.cmpi sge, %9, %11 : vector<4x512xi32>
    %cst_7 = arith.constant 0.000000e+00 : f32
    %13 = vector.broadcast %cst_7 : f32 to vector<4x512xf32>
    %14 = arith.select %12, %10, %13 : vector<4x512xi1>, vector<4x512xf32>
    %15 = arith.addf %7, %14 : vector<4x512xf32>
    %c2_i32 = arith.constant 2 : i32
    %16 = tpu.dynamic_rotate %15 by %c2_i32 dim 1 : vector<4x512xf32>, i32 -> vector<4x512xf32>
    %c2_i32_8 = arith.constant 2 : i32
    %17 = vector.broadcast %c2_i32_8 : i32 to vector<4x512xi32>
    %18 = arith.cmpi sge, %9, %17 : vector<4x512xi32>
    %cst_9 = arith.constant 0.000000e+00 : f32
    %19 = vector.broadcast %cst_9 : f32 to vector<4x512xf32>
    %20 = arith.select %18, %16, %19 : vector<4x512xi1>, vector<4x512xf32>
    %21 = arith.addf %15, %20 : vector<4x512xf32>
    %c4_i32 = arith.constant 4 : i32
    %22 = tpu.dynamic_rotate %21 by %c4_i32 dim 1 : vector<4x512xf32>, i32 -> vector<4x512xf32>
    %c4_i32_10 = arith.constant 4 : i32
    %23 = vector.broadcast %c4_i32_10 : i32 to vector<4x512xi32>
    %24 = arith.cmpi sge, %9, %23 : vector<4x512xi32>
    %cst_11 = arith.constant 0.000000e+00 : f32
    %25 = vector.broadcast %cst_11 : f32 to vector<4x512xf32>
    %26 = arith.select %24, %22, %25 : vector<4x512xi1>, vector<4x512xf32>
    %27 = arith.addf %21, %26 : vector<4x512xf32>
    %c8_i32 = arith.constant 8 : i32
    %28 = tpu.dynamic_rotate %27 by %c8_i32 dim 1 : vector<4x512xf32>, i32 -> vector<4x512xf32>
    %c8_i32_12 = arith.constant 8 : i32
    %29 = vector.broadcast %c8_i32_12 : i32 to vector<4x512xi32>
    %30 = arith.cmpi sge, %9, %29 : vector<4x512xi32>
    %cst_13 = arith.constant 0.000000e+00 : f32
    %31 = vector.broadcast %cst_13 : f32 to vector<4x512xf32>
    %32 = arith.select %30, %28, %31 : vector<4x512xi1>, vector<4x512xf32>
    %33 = arith.addf %27, %32 : vector<4x512xf32>
    %c16_i32 = arith.constant 16 : i32
    %34 = tpu.dynamic_rotate %33 by %c16_i32 dim 1 : vector<4x512xf32>, i32 -> vector<4x512xf32>
    %c16_i32_14 = arith.constant 16 : i32
    %35 = vector.broadcast %c16_i32_14 : i32 to vector<4x512xi32>
    %36 = arith.cmpi sge, %9, %35 : vector<4x512xi32>
    %cst_15 = arith.constant 0.000000e+00 : f32
    %37 = vector.broadcast %cst_15 : f32 to vector<4x512xf32>
    %38 = arith.select %36, %34, %37 : vector<4x512xi1>, vector<4x512xf32>
    %39 = arith.addf %33, %38 : vector<4x512xf32>
    %c32_i32 = arith.constant 32 : i32
    %40 = tpu.dynamic_rotate %39 by %c32_i32 dim 1 : vector<4x512xf32>, i32 -> vector<4x512xf32>
    %c32_i32_16 = arith.constant 32 : i32
    %41 = vector.broadcast %c32_i32_16 : i32 to vector<4x512xi32>
    %42 = arith.cmpi sge, %9, %41 : vector<4x512xi32>
    %cst_17 = arith.constant 0.000000e+00 : f32
    %43 = vector.broadcast %cst_17 : f32 to vector<4x512xf32>
    %44 = arith.select %42, %40, %43 : vector<4x512xi1>, vector<4x512xf32>
    %45 = arith.addf %39, %44 : vector<4x512xf32>
    %c64_i32 = arith.constant 64 : i32
    %46 = tpu.dynamic_rotate %45 by %c64_i32 dim 1 : vector<4x512xf32>, i32 -> vector<4x512xf32>
    %c64_i32_18 = arith.constant 64 : i32
    %47 = vector.broadcast %c64_i32_18 : i32 to vector<4x512xi32>
    %48 = arith.cmpi sge, %9, %47 : vector<4x512xi32>
    %cst_19 = arith.constant 0.000000e+00 : f32
    %49 = vector.broadcast %cst_19 : f32 to vector<4x512xf32>
    %50 = arith.select %48, %46, %49 : vector<4x512xi1>, vector<4x512xf32>
    %51 = arith.addf %45, %50 : vector<4x512xf32>
    %c128_i32 = arith.constant 128 : i32
    %52 = tpu.dynamic_rotate %51 by %c128_i32 dim 1 : vector<4x512xf32>, i32 -> vector<4x512xf32>
    %c128_i32_20 = arith.constant 128 : i32
    %53 = vector.broadcast %c128_i32_20 : i32 to vector<4x512xi32>
    %54 = arith.cmpi sge, %9, %53 : vector<4x512xi32>
    %cst_21 = arith.constant 0.000000e+00 : f32
    %55 = vector.broadcast %cst_21 : f32 to vector<4x512xf32>
    %56 = arith.select %54, %52, %55 : vector<4x512xi1>, vector<4x512xf32>
    %57 = arith.addf %51, %56 : vector<4x512xf32>
    %c256_i32 = arith.constant 256 : i32
    %58 = tpu.dynamic_rotate %57 by %c256_i32 dim 1 : vector<4x512xf32>, i32 -> vector<4x512xf32>
    %c256_i32_22 = arith.constant 256 : i32
    %59 = vector.broadcast %c256_i32_22 : i32 to vector<4x512xi32>
    %60 = arith.cmpi sge, %9, %59 : vector<4x512xi32>
    %cst_23 = arith.constant 0.000000e+00 : f32
    %61 = vector.broadcast %cst_23 : f32 to vector<4x512xf32>
    %62 = arith.select %60, %58, %61 : vector<4x512xi1>, vector<4x512xf32>
    %63 = arith.addf %57, %62 : vector<4x512xf32>
    %c0_24 = arith.constant 0 : index
    %c0_25 = arith.constant 0 : index
    %64 = vector.load %arg5[%c0_24, %c0_25] : memref<4x1xf32, #tpu.memory_space<vmem>>, vector<4x1xf32>
    %65 = vector.broadcast %64 : vector<4x1xf32> to vector<4x512xf32>
    %66 = arith.addf %63, %65 : vector<4x512xf32>
    %c1_i32_26 = arith.constant 1 : i32
    %67 = vector.broadcast %c1_i32_26 : i32 to vector<4x512xi32>
    %68 = arith.addi %9, %67 : vector<4x512xi32>
    %c512_i32 = arith.constant 512 : i32
    %69 = arith.muli %arg0, %c512_i32 : i32
    %70 = vector.broadcast %69 : i32 to vector<4x512xi32>
    %71 = arith.addi %68, %70 : vector<4x512xi32>
    %72 = arith.sitofp %71 : vector<4x512xi32> to vector<4x512xf32>
    %73 = arith.subf %72, %66 : vector<4x512xf32>
    %74 = vector.broadcast %8 : vector<4x1xf32> to vector<4x512xf32>
    %75 = arith.subf %74, %66 : vector<4x512xf32>
    %76 = vector.broadcast %8 : vector<4x1xf32> to vector<4x512xf32>
    %77 = arith.addf %76, %73 : vector<4x512xf32>
    %78 = arith.divf %75, %77 : vector<4x512xf32>
    %cst_27 = arith.constant 1.000000e+00 : f32
    %79 = vector.broadcast %cst_27 : f32 to vector<4x512xf32>
    %80 = arith.subf %79, %78 : vector<4x512xf32>
    %c1_i32_28 = arith.constant 1 : i32
    %81 = tpu.dynamic_rotate %80 by %c1_i32_28 dim 1 : vector<4x512xf32>, i32 -> vector<4x512xf32>
    %c0_i32_29 = arith.constant 0 : i32
    %82 = vector.broadcast %c0_i32_29 : i32 to vector<4x512xi32>
    %83 = arith.cmpi eq, %9, %82 : vector<4x512xi32>
    %c0_30 = arith.constant 0 : index
    %c0_31 = arith.constant 0 : index
    %84 = vector.load %arg6[%c0_30, %c0_31] : memref<4x1xf32, #tpu.memory_space<vmem>>, vector<4x1xf32>
    %85 = vector.shape_cast %84 : vector<4x1xf32> to vector<4x1xf32>
    %86 = vector.broadcast %85 : vector<4x1xf32> to vector<4x512xf32>
    %87 = arith.select %83, %86, %81 : vector<4x512xi1>, vector<4x512xf32>
    %88 = arith.subf %80, %87 : vector<4x512xf32>
    %c0_32 = arith.constant 0 : index
    %c0_33 = arith.constant 0 : index
    %89 = vector.load %arg4[%c0_32, %c0_33] : memref<4x1xf32, #tpu.memory_space<vmem>>, vector<4x1xf32>
    %90 = arith.mulf %5, %88 : vector<4x512xf32>
    %cst_34 = arith.constant dense<0.000000e+00> : vector<4xf32>
    %91 = vector.multi_reduction <add>, %90, %cst_34 [1] : vector<4x512xf32> to vector<4xf32>
    %92 = vector.shape_cast %91 : vector<4xf32> to vector<4x1xf32>
    %93 = arith.addf %89, %92 : vector<4x1xf32>
    %c0_35 = arith.constant 0 : index
    %c0_36 = arith.constant 0 : index
    %94 = vector.load %arg4[%c0_35, %c0_36] : memref<4x1xf32, #tpu.memory_space<vmem>>, vector<4x1xf32>
    tpu.vector_store %arg4[%c0_35, %c0_36], %93 {strides = array<i32>} : memref<4x1xf32, #tpu.memory_space<vmem>>, vector<4x1xf32>,
    %c0_37 = arith.constant 0 : index
    %c0_38 = arith.constant 0 : index
    %95 = vector.load %arg5[%c0_37, %c0_38] : memref<4x1xf32, #tpu.memory_space<vmem>>, vector<4x1xf32>
    %cst_39 = arith.constant dense<0.000000e+00> : vector<4xf32>
    %96 = vector.multi_reduction <add>, %7, %cst_39 [1] : vector<4x512xf32> to vector<4xf32>
    %97 = vector.shape_cast %96 : vector<4xf32> to vector<4x1xf32>
    %98 = arith.addf %95, %97 : vector<4x1xf32>
    %c0_40 = arith.constant 0 : index
    %c0_41 = arith.constant 0 : index
    %99 = vector.load %arg5[%c0_40, %c0_41] : memref<4x1xf32, #tpu.memory_space<vmem>>, vector<4x1xf32>
    tpu.vector_store %arg5[%c0_40, %c0_41], %98 {strides = array<i32>} : memref<4x1xf32, #tpu.memory_space<vmem>>, vector<4x1xf32>,
    %100 = vector.extract_strided_slice %80 {offsets = [0, 511], sizes = [4, 1], strides = [1, 1]} : vector<4x512xf32> to vector<4x1xf32>
    %c0_42 = arith.constant 0 : index
    %c0_43 = arith.constant 0 : index
    %101 = vector.load %arg6[%c0_42, %c0_43] : memref<4x1xf32, #tpu.memory_space<vmem>>, vector<4x1xf32>
    tpu.vector_store %arg6[%c0_42, %c0_43], %100 {strides = array<i32>} : memref<4x1xf32, #tpu.memory_space<vmem>>, vector<4x1xf32>,
    return
  }
  func.func @transform_0(%arg0: i32) -> (i32, i32) {
    %c0_i32 = arith.constant 0 : i32
    %c0_i32_0 = arith.constant 0 : i32
    %c0_i32_1 = arith.constant 0 : i32
    return %c0_i32, %c0_i32_0 : i32, i32
  }
  func.func @transform_1(%arg0: i32) -> (i32, i32) {
    %c0_i32 = arith.constant 0 : i32
    %c0_i32_0 = arith.constant 0 : i32
    return %c0_i32, %arg0 : i32, i32
  }
  func.func @transform_2(%arg0: i32) -> (i32, i32) {
    %c0_i32 = arith.constant 0 : i32
    %c0_i32_0 = arith.constant 0 : i32
    return %c0_i32, %arg0 : i32, i32
  }
  func.func @transform_3(%arg0: i32) -> (i32, i32) {
    %c0_i32 = arith.constant 0 : i32
    %c0_i32_0 = arith.constant 0 : i32
    %c0_i32_1 = arith.constant 0 : i32
    return %c0_i32, %c0_i32_0 : i32, i32
  }
}

</mosaic_0001>

<llo_original>
// kernel: lovasz_softmax_loss.2
$region0: #{lovasz_softmax_loss.2}
  #allocation0 [shape = 'u32[]', space=smem, size = 0x4, offset = 0x4, fixed_abs, tag = 'smem constant byte address 0x4 - core index']
  #allocation1 [shape = 'u32[144,128]{1,0:T(1,128)}', space=vmem, size = 0x12000, scoped, tag = 'internal scratch']
  %s0 = inlined_call_operand.vmem [shape: f32[2,4,256], index: 0, kind: input, shape index: {}]
  %s1 = inlined_call_operand.vmem [shape: s32[2,1,256], index: 1, kind: input, shape index: {}]
  %s2 = inlined_call_operand.vmem [shape: f32[4,512], index: 2, kind: output, shape index: {0}]
  %s3 = inlined_call_operand.vmem [shape: bf16[4,512], index: 3, kind: output, shape index: {1}]
  %s4 = inlined_call_operand.vmem [shape: f32[4,1], index: 4, kind: output, shape index: {2}]
  %5 = xla_tuple %s2, %s3, %s4
  %s6 = sld [smem:[#allocation0]]
  $region61: #{lovasz_softmax_loss.2} parent=0
    _
  %s8 = ssub.s32 1, %s6
  %s9 = scalar_select 0, %s8, %s6
  loop: start=0, step=1, limit=4
  $region2: #{lovasz_softmax_loss.2} parent=0 // loop_pre_header
    _
  $region3: #{lovasz_softmax_loss.2} parent=0 // loop_header
    %s11 = sphi 0, %s15
    %p12 = scmp.ge.s32.totalorder %s11, 4
    %s18 = sphi 0, %s30
    %s19 = sphi 0, %s26
    %s20 = sphi 0, %s18
    %s21 = sphi 0, %s19
    %s22 = sphi 0, %s20
    %s23 = sphi 0, %s21
    %s35 = sphi 0, %s37
    %s38 = sphi 0, %s35
    %s39 = sphi 0, %s38
    %s55 = sphi 0, %s39
    %s63 = sphi 0, %s65
    %s66 = sphi 0, %s63
    %s67 = sphi 0, %s66
    %s83 = sphi 0, %s67
    %s91 = sphi 0, %s93
    %s94 = sphi 0, %s91
    %s95 = sphi 0, %s94
    %s111 = sphi 0, %s95
    %s119 = sphi 0, %s121
    %s122 = sphi 0, %s119
    %s123 = sphi 0, %s122
    %s139 = sphi 0, %s123
    %s143 = sphi 0, %s143
    %s145 = sphi 0, %s143
    %s146 = sphi 0, %s145
    %s160 = sphi 0, %s146
  $region4: #{lovasz_softmax_loss.2} parent=0 // loop_header_branch
    %14 = sbr.rel (%p12) target = $region8
  $region5: #{lovasz_softmax_loss.2} parent=0 // loop_body
    %s16 = ssub.s32 %s11, 1
    %s17 = ssub.s32 %s11, 2
    %s24 = sadd.s32 1, %s19
    %p25 = scmp.ge.s32.totalorder %s24, 1
    %s26 = scalar_select %p25, 0, %s24
    %s27 = sadd.s32 1, %s18
    %s28 = scalar_select %p25, %s27, %s18
    %p29 = scmp.ge.s32.totalorder %s28, 2
    %s30 = scalar_select %p29, 0, %s28
    %s31 = ssub.s32 %s18, %s30
    %s32 = ssub.s32 %s19, %s26
    %s33 = sor.u32 %s31, %s32
    %p34 = scmp.eq.s32.totalorder %s33, 0
    %s36 = sadd.s32 %s35, 1
    %s37 = scalar_select %p34, %s35, %s36
    %p40 = pneg %p34
    %p41 = scmp.eq.s32.totalorder %s11, 1
    %p42 = por %p40, %p41
    %p43 = scmp.ne.s32.totalorder %s35, %s38
    %p44 = scmp.eq.s32.totalorder %s11, 0
    %p45 = por %p43, %p44
    %p46 = scmp.ne.s32.totalorder %s35, %s38
    %p47 = scmp.eq.s32.totalorder %s16, 1
    %p48 = por %p46, %p47
    %p49 = scmp.ne.s32.totalorder %s38, %s39
    %p50 = scmp.eq.s32.totalorder %s16, 0
    %p51 = por %p49, %p50
    %p52 = scmp.ne.s32.totalorder %s38, %s39
    %p53 = scmp.eq.s32.totalorder %s17, 1
    %p54 = por %p52, %p53
    %p56 = scmp.ne.s32.totalorder %s39, %s55
    %p57 = scmp.eq.s32.totalorder %s17, 0
    %p58 = por %p56, %p57
    %s59 = ssub.s32 %s18, %s30
    %s60 = ssub.s32 %s19, %s26
    %s61 = sor.u32 %s59, %s60
    %p62 = scmp.eq.s32.totalorder %s61, 0
    %s64 = sadd.s32 %s63, 1
    %s65 = scalar_select %p62, %s63, %s64
    %p68 = pneg %p62
    %p69 = scmp.eq.s32.totalorder %s11, 1
    %p70 = por %p68, %p69
    %p71 = scmp.ne.s32.totalorder %s63, %s66
    %p72 = scmp.eq.s32.totalorder %s11, 0
    %p73 = por %p71, %p72
    %p74 = scmp.ne.s32.totalorder %s63, %s66
    %p75 = scmp.eq.s32.totalorder %s16, 1
    %p76 = por %p74, %p75
    %p77 = scmp.ne.s32.totalorder %s66, %s67
    %p78 = scmp.eq.s32.totalorder %s16, 0
    %p79 = por %p77, %p78
    %p80 = scmp.ne.s32.totalorder %s66, %s67
    %p81 = scmp.eq.s32.totalorder %s17, 1
    %p82 = por %p80, %p81
    %p84 = scmp.ne.s32.totalorder %s67, %s83
    %p85 = scmp.eq.s32.totalorder %s17, 0
    %p86 = por %p84, %p85
    %s87 = sadd.s32 %s18, %s19
    %s88 = sadd.s32 %s30, %s26
    %s89 = ssub.s32 %s87, %s88
    %p90 = scmp.eq.s32.totalorder %s89, 0
    %s92 = sadd.s32 %s91, 1
    %s93 = scalar_select %p90, %s91, %s92
    %p96 = pneg %p90
    %p97 = scmp.eq.s32.totalorder %s11, 1
    %p98 = por %p96, %p97
    %p99 = scmp.ne.s32.totalorder %s91, %s94
    %p100 = scmp.eq.s32.totalorder %s11, 0
    %p101 = por %p99, %p100
    %p102 = scmp.ne.s32.totalorder %s91, %s94
    %p103 = scmp.eq.s32.totalorder %s16, 1
    %p104 = por %p102, %p103
    %p105 = scmp.ne.s32.totalorder %s94, %s95
    %p106 = scmp.eq.s32.totalorder %s16, 0
    %p107 = por %p105, %p106
    %p108 = scmp.ne.s32.totalorder %s94, %s95
    %p109 = scmp.eq.s32.totalorder %s17, 1
    %p110 = por %p108, %p109
    %p112 = scmp.ne.s32.totalorder %s95, %s111
    %p113 = scmp.eq.s32.totalorder %s17, 0
    %p114 = por %p112, %p113
    %s115 = sadd.s32 %s18, %s19
    %s116 = sadd.s32 %s30, %s26
    %s117 = ssub.s32 %s115, %s116
    %p118 = scmp.eq.s32.totalorder %s117, 0
    %s120 = sadd.s32 %s119, 1
    %s121 = scalar_select %p118, %s119, %s120
    %p124 = pneg %p118
    %p125 = scmp.eq.s32.totalorder %s11, 1
    %p126 = por %p124, %p125
    %p127 = scmp.ne.s32.totalorder %s119, %s122
    %p128 = scmp.eq.s32.totalorder %s11, 0
    %p129 = por %p127, %p128
    %p130 = scmp.ne.s32.totalorder %s119, %s122
    %p131 = scmp.eq.s32.totalorder %s16, 1
    %p132 = por %p130, %p131
    %p133 = scmp.ne.s32.totalorder %s122, %s123
    %p134 = scmp.eq.s32.totalorder %s16, 0
    %p135 = por %p133, %p134
    %p136 = scmp.ne.s32.totalorder %s122, %s123
    %p137 = scmp.eq.s32.totalorder %s17, 1
    %p138 = por %p136, %p137
    %p140 = scmp.ne.s32.totalorder %s123, %s139
    %p141 = scmp.eq.s32.totalorder %s17, 0
    %p142 = por %p140, %p141
    %s144 = sadd.s32 %s143, 1
    %p147 = scmp.eq.s32.totalorder %s11, 1
    %p148 = scmp.ne.s32.totalorder %s143, %s145
    %p149 = scmp.eq.s32.totalorder %s11, 0
    %p150 = por %p148, %p149
    %p151 = scmp.ne.s32.totalorder %s143, %s145
    %p152 = scmp.eq.s32.totalorder %s16, 1
    %p153 = por %p151, %p152
    %p154 = scmp.ne.s32.totalorder %s145, %s146
    %p155 = scmp.eq.s32.totalorder %s16, 0
    %p156 = por %p154, %p155
    %p157 = scmp.ne.s32.totalorder %s145, %s146
    %p158 = scmp.eq.s32.totalorder %s17, 1
    %p159 = por %p157, %p158
    %p161 = scmp.ne.s32.totalorder %s146, %s160
    %p162 = scmp.eq.s32.totalorder %s17, 0
    %p163 = por %p161, %p162
    %p164 = scmp.le.s32.totalorder 1, %s11
    %p165 = scmp.lt.s32.totalorder %s11, 3
    %p166 = pnand %p164, %p165
    %p167 = pneg %p166
    // Predicated region
    $region9: #{lovasz_softmax_loss.2} parent=5 // pred_check
      _
    $region10: #{lovasz_softmax_loss.2} parent=5 // pred_check_branch
      %169 = sbr.rel (%p166) target = $region12
    $region11: #{lovasz_softmax_loss.2} parent=5 // pred_region
      %s170 = ssub.s32 %s11, 1
    $region12: #{lovasz_softmax_loss.2} parent=5 // pred_fallthru
      _
    %p171 = scmp.lt.s32.totalorder %s11, 2
    // Predicated region
    $region13: #{lovasz_softmax_loss.2} parent=5 // pred_check
      %p172 = pneg %p171
    $region14: #{lovasz_softmax_loss.2} parent=5 // pred_check_branch
      %174 = sbr.rel (%p172) target = $region16
    $region15: #{lovasz_softmax_loss.2} parent=5 // pred_region
      // Predicated region
      $region17: #{lovasz_softmax_loss.2} parent=15 // pred_check
        %p175 = pneg %p45
      $region18: #{lovasz_softmax_loss.2} parent=15 // pred_check_branch
        %177 = sbr.rel (%p175) target = $region20
      $region19: #{lovasz_softmax_loss.2} parent=15 // pred_region
        %s178 = smul.u32 2, %s19
        %p179 = scmp.lt.s32.totalorder %s18, 1
        %s180 = scalar_select %p179, %s18, 1
        %p181 = scmp.lt.s32.totalorder %s178, 1
        %s182 = scalar_select %p181, %s178, 1
        %s183 = smul.addr %s180, 2
        %s184 = sadd.s32 %s182, %s183
        %s185 = smul.addr %s184, 4
        %s186 = scalar_lea.vmem %s0, %s185
        %s187 = smul.u32 2, %s19
      $region20: #{lovasz_softmax_loss.2} parent=15 // pred_fallthru
        _
      // Predicated region
      $region21: #{lovasz_softmax_loss.2} parent=15 // pred_check
        %p188 = pneg %p73
      $region22: #{lovasz_softmax_loss.2} parent=15 // pred_check_branch
        %190 = sbr.rel (%p188) target = $region24
      $region23: #{lovasz_softmax_loss.2} parent=15 // pred_region
        %s191 = smul.u32 2, %s19
        %p192 = scmp.lt.s32.totalorder %s18, 1
        %s193 = scalar_select %p192, %s18, 1
        %p194 = scmp.lt.s32.totalorder %s191, 1
        %s195 = scalar_select %p194, %s191, 1
        %s196 = smul.addr %s193, 2
        %s197 = sadd.s32 %s195, %s196
        %s198 = scalar_lea.vmem %s1, %s197
        %s199 = smul.u32 2, %s19
      $region24: #{lovasz_softmax_loss.2} parent=15 // pred_fallthru
        _
    $region16: #{lovasz_softmax_loss.2} parent=5 // pred_fallthru
      _
    %p200 = scmp.le.s32.totalorder 1, %s11
    %p201 = scmp.lt.s32.totalorder %s11, 3
    %p202 = pnand %p200, %p201
    %p203 = pneg %p202
    // Predicated region
    $region25: #{lovasz_softmax_loss.2} parent=5 // pred_check
      _
    $region26: #{lovasz_softmax_loss.2} parent=5 // pred_check_branch
      %205 = sbr.rel (%p202) target = $region28
    $region27: #{lovasz_softmax_loss.2} parent=5 // pred_region
      %s206 = ssub.s32 %s11, 1
      %s207 = smul.u32 2, %s21
      %p208 = scmp.lt.s32.totalorder %s20, 1
      %s209 = scalar_select %p208, %s20, 1
      %p210 = scmp.lt.s32.totalorder %s207, 1
      %s211 = scalar_select %p210, %s207, 1
      %s212 = smul.addr %s209, 2
      %s213 = sadd.s32 %s211, %s212
      %s214 = smul.addr %s213, 4
      %s215 = scalar_lea.vmem %s0, %s214
      %p216 = pneg %p51
      %p217 = pneg %p48
      %s218 = smul.u32 2, %s21
      %p219 = scmp.lt.s32.totalorder %s20, 1
      %s220 = scalar_select %p219, %s20, 1
      %p221 = scmp.lt.s32.totalorder %s218, 1
      %s222 = scalar_select %p221, %s218, 1
      %s223 = smul.addr %s220, 2
      %s224 = sadd.s32 %s222, %s223
      %s225 = scalar_lea.vmem %s1, %s224
      %p226 = pneg %p79
      %p227 = pneg %p76
      %p228 = pneg %p107
      %p229 = pneg %p104
      %s230 = sadd.s32 %s20, %s21
      %s231 = smul.u32 2, %s230
      %p232 = scmp.lt.s32.totalorder %s231, 3
      %s233 = scalar_select %p232, %s231, 3
      %s234 = smul.addr %s233, 4
      %s235 = scalar_lea.vmem %s2, %s234
      %p236 = pneg %p135
      %p237 = pneg %p132
      %s238 = sadd.s32 %s20, %s21
      %s239 = smul.u32 2, %s238
      %p240 = scmp.lt.s32.totalorder %s239, 3
      %s241 = scalar_select %p240, %s239, 3
      %s242 = smul.addr %s241, 2
      %s243 = scalar_lea.vmem %s3, %s242
      %p244 = pneg %p156
      %p245 = pneg %p153
      %s246 = smul.u32 2, %s21
      %p247 = scmp.lt.s32.totalorder %s20, 1
      %s248 = scalar_select %p247, %s20, 1
      %p249 = scmp.lt.s32.totalorder %s246, 1
      %s250 = scalar_select %p249, %s246, 1
      %s251 = smul.addr %s248, 2
      %s252 = sadd.s32 %s250, %s251
      %s253 = smul.addr %s252, 4
      %s254 = scalar_lea.vmem %s0, %s253
      %s255 = smul.u32 2, %s21
      %s256 = smul.u32 2, %s21
      %p257 = scmp.lt.s32.totalorder %s20, 1
      %s258 = scalar_select %p257, %s20, 1
      %p259 = scmp.lt.s32.totalorder %s256, 1
      %s260 = scalar_select %p259, %s256, 1
      %s261 = smul.addr %s258, 2
      %s262 = sadd.s32 %s260, %s261
      %s263 = scalar_lea.vmem %s1, %s262
      %s264 = smul.u32 2, %s21
      %s265 = sadd.s32 %s20, %s21
      %s266 = smul.u32 2, %s265
      %p267 = scmp.lt.s32.totalorder %s266, 3
      %s268 = scalar_select %p267, %s266, 3
      %s269 = smul.addr %s268, 4
      %s270 = scalar_lea.vmem %s2, %s269
      %s271 = sadd.s32 %s20, %s21
      %s272 = smul.u32 2, %s271
      %s273 = sadd.s32 %s20, %s21
      %s274 = smul.u32 2, %s273
      %p275 = scmp.lt.s32.totalorder %s274, 3
      %s276 = scalar_select %p275, %s274, 3
      %s277 = smul.addr %s276, 2
      %s278 = scalar_lea.vmem %s3, %s277
      %s279 = sadd.s32 %s20, %s21
      %s280 = smul.u32 2, %s279
      %v281 = vld [vmem:[%s254] sm:$0xff]
      %v283 = vcombine.high %v281, %v281
      %vm285 = vcmask 1043456
      %v286 = vsel %vm285, %v281, -inf
      %v287 = vrot.slane %v286, 4
      %v288 = vmax.f32 %v286, %v287
      %v289 = vrot.slane %v288, 2
      %v290 = vmax.f32 %v288, %v289
      %v291 = vrot.slane %v290, 1
      %v292 = vmax.f32 %v290, %v291
      %v293 = vsel %vm285, %v283, -inf
      %v294 = vrot.slane %v293, 4
      %v295 = vmax.f32 %v293, %v294
      %v296 = vrot.slane %v295, 2
      %v297 = vmax.f32 %v295, %v296
      %v298 = vrot.slane %v297, 1
      %v299 = vmax.f32 %v297, %v298
      %v302 = vcombine.low %v292, %v299
      %v304 = vsub.f32 %v281, %v302
      %v305 = vmul.f32 %v304, 1.442695
      %v306 = vpow.pop %v305
      %v308 = vcombine.high %v306, %v306
      %v310 = vsel %vm285, %v306, 0.0
      %v311 = vrot.slane %v310, 4
      %v312 = vadd.f32 %v310, %v311
      %v313 = vrot.slane %v312, 2
      %v314 = vadd.f32 %v312, %v313
      %v315 = vrot.slane %v314, 1
      %v316 = vadd.f32 %v314, %v315
      %v317 = vsel %vm285, %v308, 0.0
      %v318 = vrot.slane %v317, 4
      %v319 = vadd.f32 %v317, %v318
      %v320 = vrot.slane %v319, 2
      %v321 = vadd.f32 %v319, %v320
      %v322 = vrot.slane %v321, 1
      %v323 = vadd.f32 %v321, %v322
      %v326 = vcombine.low %v316, %v323
      %v328 = vrcp.pop %v326
      %v329 = vmul.f32 %v306, %v328
      %v330 = vld [vmem:[%s263] sm:$0x3]
      %v331 = vlaneseq
      %v332 = vshrl.u32 %v331, 7
      %v333 = vlaneseq
      %v334 = vshrl.u32 %v333, 7
      %v335 = vsub.s32 0, %v334
      %v336 = vrot.slane %v330, %v335
      %v337 = vlaneseq
      %v338 = vshrl.u32 %v337, 7
      %v339 = vsub.s32 1, %v338
      %v340 = vrot.slane %v330, %v339
      %vm341 = vcmp.eq.s32.totalorder %v336, %v332
      %vm342 = vcmp.eq.s32.totalorder %v340, %v332
      %v343 = vsel %vm341, 1, 0
      %v344 = vsel %vm342, 1, 0
      %v345 = vcvt.s32.f32 %v343
      %v346 = vcvt.s32.f32 %v344
      %vm347 = vcmp.ne.s32.totalorder %v330, 255
      %v349 = vcombine.high %v329, %v329
      %v351 = vsub.f32 %v345, %v329
      %v352 = vsub.f32 %v346, %v349
      %v353 = vand.u32 2147483647, %v351
      %v354 = vand.u32 2147483647, %v352
      %v355 = vsub.f32 0.0, %v353
      %v356 = vsub.f32 0.0, %v354
      %v357 = vsel %vm347, 1, 0
      %v358 = vlaneseq
      %v359 = vshrl.u32 %v358, 7
      %v360 = vsub.s32 0, %v359
      %v361 = vrot.slane %v357, %v360
      %v362 = vlaneseq
      %v363 = vshrl.u32 %v362, 7
      %v364 = vsub.s32 1, %v363
      %v365 = vrot.slane %v357, %v364
      %vm366 = vcmp.eq.s32.totalorder %v361, 1
      %vm367 = vcmp.eq.s32.totalorder %v365, 1
      %v368 = vsel %vm366, %v355, 0.0
      %v369 = vsel %vm367, %v356, 0.0
      %v372 = vcombine.low %v368, %v369
      %374 = vst [vmem:[%s270] sm:$0xff] %v372
      %v375 = vpack.c.bf16 %v345, %v345
      %v376 = vpack.c.bf16 %v346, %v346
      %v379 = vcombine.low %v375, %v376
      %v381 = vunpack.c.l.s4 1983009808
      %v382 = vunpack.c.0.s8 %v381
      %v383 = vlaneseq
      %v384 = vshrl.u32 %v383, 7
      %v385 = vsub.s32 %v382, %v384
      %v386 = vrot.slane %v379, %v385
      %388 = vst [vmem:[%s278] sm:$0xf] %v386
      %p389 = scmp.eq.s32.totalorder %s20, 0
      %p390 = scmp.eq.s32.totalorder %s21, 0
      %p391 = pnand %p389, %p390
      %p392 = pneg %p391
      // Predicated region
      $region29: #{lovasz_softmax_loss.2} parent=27 // pred_check
        _
      $region30: #{lovasz_softmax_loss.2} parent=27 // pred_check_branch
        %394 = sbr.rel (%p391) target = $region32
      $region31: #{lovasz_softmax_loss.2} parent=27 // pred_region
        %vm395 = vcmask 3072
        %396 = vst.msk [vmem:[%s4] sm:$0xf] %vm395, 0.0
      $region32: #{lovasz_softmax_loss.2} parent=27 // pred_fallthru
        _
      %v397 = vld [vmem:[%s4] sm:$0xf]
      %v398 = vsel %vm285, %v345, 0.0
      %v399 = vsel %vm285, %v346, 0.0
      %v400 = vadd.f32 %v398, %v399
      %401 = vadd.xlane.f32.xlu0 %v400
      %v402 = vpop.xlane.xlu0 %401
      %v403 = vadd.f32 %v397, %v402
      %vm404 = vcmask 3072
      %405 = vst.msk [vmem:[%s4] sm:$0xf] %vm404, %v403
      %s406 = sadd.s32 %s20, %s21
      %s407 = smul.u32 2, %s406
      %p408 = scmp.lt.s32.totalorder %s407, 3
      %s409 = scalar_select %p408, %s407, 3
      %s410 = smul.addr %s409, 4
      %s411 = scalar_lea.vmem %s2, %s410
      %s412 = sadd.s32 %s20, %s21
      %s413 = smul.u32 2, %s412
      %p414 = scmp.lt.s32.totalorder %s413, 3
      %s415 = scalar_select %p414, %s413, 3
      %s416 = smul.addr %s415, 2
      %s417 = scalar_lea.vmem %s3, %s416
      // Predicated region
      $region33: #{lovasz_softmax_loss.2} parent=27 // pred_check
        %p418 = pneg %p104
      $region34: #{lovasz_softmax_loss.2} parent=27 // pred_check_branch
        %420 = sbr.rel (%p418) target = $region36
      $region35: #{lovasz_softmax_loss.2} parent=27 // pred_region
        %s421 = sadd.s32 %s20, %s21
        %s422 = smul.u32 2, %s421
      $region36: #{lovasz_softmax_loss.2} parent=27 // pred_fallthru
        _
      // Predicated region
      $region37: #{lovasz_softmax_loss.2} parent=27 // pred_check
        %p423 = pneg %p132
      $region38: #{lovasz_softmax_loss.2} parent=27 // pred_check_branch
        %425 = sbr.rel (%p423) target = $region40
      $region39: #{lovasz_softmax_loss.2} parent=27 // pred_region
        %s426 = sadd.s32 %s20, %s21
        %s427 = smul.u32 2, %s426
      $region40: #{lovasz_softmax_loss.2} parent=27 // pred_fallthru
        _
      // Predicated region
      $region41: #{lovasz_softmax_loss.2} parent=27 // pred_check
        %p428 = pneg %p153
      $region42: #{lovasz_softmax_loss.2} parent=27 // pred_check_branch
        %430 = sbr.rel (%p428) target = $region44
      $region43: #{lovasz_softmax_loss.2} parent=27 // pred_region
        _
      $region44: #{lovasz_softmax_loss.2} parent=27 // pred_fallthru
        _
      // Predicated region
      $region45: #{lovasz_softmax_loss.2} parent=27 // pred_check
        %p431 = pneg %p153
      $region46: #{lovasz_softmax_loss.2} parent=27 // pred_check_branch
        %433 = sbr.rel (%p431) target = $region48
      $region47: #{lovasz_softmax_loss.2} parent=27 // pred_region
        _
      $region48: #{lovasz_softmax_loss.2} parent=27 // pred_fallthru
        _
    $region28: #{lovasz_softmax_loss.2} parent=5 // pred_fallthru
      _
    %p434 = scmp.le.s32.totalorder 2, %s11
    // Predicated region
    $region49: #{lovasz_softmax_loss.2} parent=5 // pred_check
      %p435 = pneg %p434
    $region50: #{lovasz_softmax_loss.2} parent=5 // pred_check_branch
      %437 = sbr.rel (%p435) target = $region52
    $region51: #{lovasz_softmax_loss.2} parent=5 // pred_region
      %s438 = ssub.s32 %s11, 2
      // Predicated region
      $region53: #{lovasz_softmax_loss.2} parent=51 // pred_check
        %p439 = pneg %p110
      $region54: #{lovasz_softmax_loss.2} parent=51 // pred_check_branch
        %441 = sbr.rel (%p439) target = $region56
      $region55: #{lovasz_softmax_loss.2} parent=51 // pred_region
        %s442 = sadd.s32 %s22, %s23
        %s443 = smul.u32 2, %s442
        %p444 = scmp.lt.s32.totalorder %s443, 3
        %s445 = scalar_select %p444, %s443, 3
        %s446 = smul.addr %s445, 4
        %s447 = scalar_lea.vmem %s2, %s446
      $region56: #{lovasz_softmax_loss.2} parent=51 // pred_fallthru
        _
      // Predicated region
      $region57: #{lovasz_softmax_loss.2} parent=51 // pred_check
        %p448 = pneg %p138
      $region58: #{lovasz_softmax_loss.2} parent=51 // pred_check_branch
        %450 = sbr.rel (%p448) target = $region60
      $region59: #{lovasz_softmax_loss.2} parent=51 // pred_region
        %s451 = sadd.s32 %s22, %s23
        %s452 = smul.u32 2, %s451
        %p453 = scmp.lt.s32.totalorder %s452, 3
        %s454 = scalar_select %p453, %s452, 3
        %s455 = smul.addr %s454, 2
        %s456 = scalar_lea.vmem %s3, %s455
      $region60: #{lovasz_softmax_loss.2} parent=51 // pred_fallthru
        _
    $region52: #{lovasz_softmax_loss.2} parent=5 // pred_fallthru
      _
  $region6: #{lovasz_softmax_loss.2} parent=0 // loop_footer
    %s15 = sadd.s32 1, %s11
  $region7: #{lovasz_softmax_loss.2} parent=0 // loop_footer_branch
    %10 = sbr.rel target = $region3
  $region8: #{lovasz_softmax_loss.2} parent=0 // loop_exit
    _

// kernel: lovasz_softmax_loss.3
$region0: #{lovasz_softmax_loss.3}
  #allocation0 [shape = 'u32[]', space=smem, size = 0x4, offset = 0x4, fixed_abs, tag = 'smem constant byte address 0x4 - core index']
  #allocation1 [shape = 'u32[144,128]{1,0:T(1,128)}', space=vmem, size = 0x12000, scoped, tag = 'internal scratch']
  #allocation2 [shape = 'f32[4,1]{1,0:T(4,128)}', space=vmem, size = 0x800, scoped, tag = 'scratch operand']
  #allocation3 [shape = 'f32[4,1]{1,0:T(4,128)}', space=vmem, size = 0x800, scoped, tag = 'scratch operand']
  %s0 = inlined_call_operand.vmem [shape: f32[4,1], index: 0, kind: input, shape index: {}]
  %s1 = inlined_call_operand.vmem [shape: f32[4,512], index: 1, kind: input, shape index: {}]
  %s2 = inlined_call_operand.vmem [shape: bf16[4,512], index: 2, kind: input, shape index: {}]
  %s3 = inlined_call_operand.vmem [shape: f32[4,1], index: 3, kind: output, shape index: {}]
  %s4 = sld [smem:[#allocation0]]
  $region26: #{lovasz_softmax_loss.3} parent=0
    _
  %s6 = ssub.s32 1, %s4
  %s7 = scalar_select 0, %s6, %s4
  // Predicated region
  $region2: #{lovasz_softmax_loss.3} parent=0 // pred_check
    _
  $region3: #{lovasz_softmax_loss.3} parent=0 // pred_check_branch
    %9 = sbr.rel (0) target = $region5
  $region4: #{lovasz_softmax_loss.3} parent=0 // pred_region
    _
  $region5: #{lovasz_softmax_loss.3} parent=0 // pred_fallthru
    _
  // Predicated region
  $region6: #{lovasz_softmax_loss.3} parent=0 // pred_check
    _
  $region7: #{lovasz_softmax_loss.3} parent=0 // pred_check_branch
    %11 = sbr.rel (0) target = $region9
  $region8: #{lovasz_softmax_loss.3} parent=0 // pred_region
    _
  $region9: #{lovasz_softmax_loss.3} parent=0 // pred_fallthru
    _
  // Predicated region
  $region10: #{lovasz_softmax_loss.3} parent=0 // pred_check
    _
  $region11: #{lovasz_softmax_loss.3} parent=0 // pred_check_branch
    %13 = sbr.rel (0) target = $region13
  $region12: #{lovasz_softmax_loss.3} parent=0 // pred_region
    _
  $region13: #{lovasz_softmax_loss.3} parent=0 // pred_fallthru
    _
  %p14 = scmp.eq.s32.totalorder 0, 0
  // Predicated region
  $region14: #{lovasz_softmax_loss.3} parent=0 // pred_check
    %p15 = pneg %p14
  $region15: #{lovasz_softmax_loss.3} parent=0 // pred_check_branch
    %17 = sbr.rel (%p15) target = $region17
  $region16: #{lovasz_softmax_loss.3} parent=0 // pred_region
    %vm18 = vcmask 3072
    %19 = vst.msk [vmem:[%s3] sm:$0xf] %vm18, 0.0
    %20 = vst.msk [vmem:[#allocation2] sm:$0xf] %vm18, 0.0
    %21 = vst.msk [vmem:[#allocation3] sm:$0xf] %vm18, 0.0
  $region17: #{lovasz_softmax_loss.3} parent=0 // pred_fallthru
    _
  %v22 = vld [vmem:[%s1] sm:$0xff]
  %v23 = vld [vmem:[%s1 + $0x8] sm:$0xff]
  %v24 = vsub.f32 0.0, %v22
  %v25 = vsub.f32 0.0, %v23
  %v26 = vld [vmem:[%s2] sm:$0xff]
  %v27 = vunpack.c.l.bf16 %v26
  %v28 = vunpack.c.h.bf16 %v26
  %v29 = vld [vmem:[%s0] sm:$0xf]
  %v30 = vlaneseq
  %v31 = vand.u32 %v30, 127
  %v32 = vadd.s32 %v31, 128
  %v33 = vadd.s32 %v31, 256
  %v34 = vadd.s32 %v31, 384
  %v37 = vcombine.high %v27, %v27
  %v38 = vcombine.high %v28, %v28
  %41 = vrot.lane.b32.xlu0 %v27, 1
  %v42 = vpop.permute.xlu0 %41
  %43 = vrot.lane.b32.xlu0 %v37, 1
  %v44 = vpop.permute.xlu0 %43
  %45 = vrot.lane.b32.xlu0 %v28, 1
  %v46 = vpop.permute.xlu0 %45
  %47 = vrot.lane.b32.xlu0 %v38, 1
  %v48 = vpop.permute.xlu0 %47
  %vm49 = vcmp.lt.s32.totalorder %v31, 1
  %v50 = vsel %vm49, %v46, %v48
  %v51 = vsel %vm49, %v44, %v46
  %v52 = vsel %vm49, %v42, %v44
  %v53 = vsel %vm49, %v48, %v42
  %vm54 = vcmp.ge.s32.totalorder %v31, 1
  %vm55 = vcmp.ge.s32.totalorder %v32, 1
  %vm56 = vcmp.ge.s32.totalorder %v33, 1
  %vm57 = vcmp.ge.s32.totalorder %v34, 1
  %v58 = vsel %vm54, %v53, 0.0
  %v59 = vsel %vm55, %v52, 0.0
  %v60 = vsel %vm56, %v51, 0.0
  %v61 = vsel %vm57, %v50, 0.0
  %v66 = vcombine.low %v58, %v59
  %v67 = vcombine.low %v60, %v61
  %v70 = vadd.f32 %v27, %v66
  %v71 = vadd.f32 %v28, %v67
  %v74 = vcombine.high %v70, %v70
  %v75 = vcombine.high %v71, %v71
  %78 = vrot.lane.b32.xlu0 %v70, 2
  %v79 = vpop.permute.xlu0 %78
  %80 = vrot.lane.b32.xlu0 %v74, 2
  %v81 = vpop.permute.xlu0 %80
  %82 = vrot.lane.b32.xlu0 %v71, 2
  %v83 = vpop.permute.xlu0 %82
  %84 = vrot.lane.b32.xlu0 %v75, 2
  %v85 = vpop.permute.xlu0 %84
  %vm86 = vcmp.lt.s32.totalorder %v31, 2
  %v87 = vsel %vm86, %v83, %v85
  %v88 = vsel %vm86, %v81, %v83
  %v89 = vsel %vm86, %v79, %v81
  %v90 = vsel %vm86, %v85, %v79
  %vm91 = vcmp.ge.s32.totalorder %v31, 2
  %vm92 = vcmp.ge.s32.totalorder %v32, 2
  %vm93 = vcmp.ge.s32.totalorder %v33, 2
  %vm94 = vcmp.ge.s32.totalorder %v34, 2
  %v95 = vsel %vm91, %v90, 0.0
  %v96 = vsel %vm92, %v89, 0.0
  %v97 = vsel %vm93, %v88, 0.0
  %v98 = vsel %vm94, %v87, 0.0
  %v103 = vcombine.low %v95, %v96
  %v104 = vcombine.low %v97, %v98
  %v107 = vadd.f32 %v70, %v103
  %v108 = vadd.f32 %v71, %v104
  %v111 = vcombine.high %v107, %v107
  %v112 = vcombine.high %v108, %v108
  %115 = vrot.lane.b32.xlu0 %v107, 4
  %v116 = vpop.permute.xlu0 %115
  %117 = vrot.lane.b32.xlu0 %v111, 4
  %v118 = vpop.permute.xlu0 %117
  %119 = vrot.lane.b32.xlu0 %v108, 4
  %v120 = vpop.permute.xlu0 %119
  %121 = vrot.lane.b32.xlu0 %v112, 4
  %v122 = vpop.permute.xlu0 %121
  %vm123 = vcmp.lt.s32.totalorder %v31, 4
  %v124 = vsel %vm123, %v120, %v122
  %v125 = vsel %vm123, %v118, %v120
  %v126 = vsel %vm123, %v116, %v118
  %v127 = vsel %vm123, %v122, %v116
  %vm128 = vcmp.ge.s32.totalorder %v31, 4
  %vm129 = vcmp.ge.s32.totalorder %v32, 4
  %vm130 = vcmp.ge.s32.totalorder %v33, 4
  %vm131 = vcmp.ge.s32.totalorder %v34, 4
  %v132 = vsel %vm128, %v127, 0.0
  %v133 = vsel %vm129, %v126, 0.0
  %v134 = vsel %vm130, %v125, 0.0
  %v135 = vsel %vm131, %v124, 0.0
  %v140 = vcombine.low %v132, %v133
  %v141 = vcombine.low %v134, %v135
  %v144 = vadd.f32 %v107, %v140
  %v145 = vadd.f32 %v108, %v141
  %v148 = vcombine.high %v144, %v144
  %v149 = vcombine.high %v145, %v145
  %152 = vrot.lane.b32.xlu0 %v144, 8
  %v153 = vpop.permute.xlu0 %152
  %154 = vrot.lane.b32.xlu0 %v148, 8
  %v155 = vpop.permute.xlu0 %154
  %156 = vrot.lane.b32.xlu0 %v145, 8
  %v157 = vpop.permute.xlu0 %156
  %158 = vrot.lane.b32.xlu0 %v149, 8
  %v159 = vpop.permute.xlu0 %158
  %vm160 = vcmp.lt.s32.totalorder %v31, 8
  %v161 = vsel %vm160, %v157, %v159
  %v162 = vsel %vm160, %v155, %v157
  %v163 = vsel %vm160, %v153, %v155
  %v164 = vsel %vm160, %v159, %v153
  %vm165 = vcmp.ge.s32.totalorder %v31, 8
  %vm166 = vcmp.ge.s32.totalorder %v32, 8
  %vm167 = vcmp.ge.s32.totalorder %v33, 8
  %vm168 = vcmp.ge.s32.totalorder %v34, 8
  %v169 = vsel %vm165, %v164, 0.0
  %v170 = vsel %vm166, %v163, 0.0
  %v171 = vsel %vm167, %v162, 0.0
  %v172 = vsel %vm168, %v161, 0.0
  %v177 = vcombine.low %v169, %v170
  %v178 = vcombine.low %v171, %v172
  %v181 = vadd.f32 %v144, %v177
  %v182 = vadd.f32 %v145, %v178
  %v185 = vcombine.high %v181, %v181
  %v186 = vcombine.high %v182, %v182
  %189 = vrot.lane.b32.xlu0 %v181, 16
  %v190 = vpop.permute.xlu0 %189
  %191 = vrot.lane.b32.xlu0 %v185, 16
  %v192 = vpop.permute.xlu0 %191
  %193 = vrot.lane.b32.xlu0 %v182, 16
  %v194 = vpop.permute.xlu0 %193
  %195 = vrot.lane.b32.xlu0 %v186, 16
  %v196 = vpop.permute.xlu0 %195
  %vm197 = vcmp.lt.s32.totalorder %v31, 16
  %v198 = vsel %vm197, %v194, %v196
  %v199 = vsel %vm197, %v192, %v194
  %v200 = vsel %vm197, %v190, %v192
  %v201 = vsel %vm197, %v196, %v190
  %vm202 = vcmp.ge.s32.totalorder %v31, 16
  %vm203 = vcmp.ge.s32.totalorder %v32, 16
  %vm204 = vcmp.ge.s32.totalorder %v33, 16
  %vm205 = vcmp.ge.s32.totalorder %v34, 16
  %v206 = vsel %vm202, %v201, 0.0
  %v207 = vsel %vm203, %v200, 0.0
  %v208 = vsel %vm204, %v199, 0.0
  %v209 = vsel %vm205, %v198, 0.0
  %v214 = vcombine.low %v206, %v207
  %v215 = vcombine.low %v208, %v209
  %v218 = vadd.f32 %v181, %v214
  %v219 = vadd.f32 %v182, %v215
  %v222 = vcombine.high %v218, %v218
  %v223 = vcombine.high %v219, %v219
  %226 = vrot.lane.b32.xlu0 %v218, 32
  %v227 = vpop.permute.xlu0 %226
  %228 = vrot.lane.b32.xlu0 %v222, 32
  %v229 = vpop.permute.xlu0 %228
  %230 = vrot.lane.b32.xlu0 %v219, 32
  %v231 = vpop.permute.xlu0 %230
  %232 = vrot.lane.b32.xlu0 %v223, 32
  %v233 = vpop.permute.xlu0 %232
  %vm234 = vcmp.lt.s32.totalorder %v31, 32
  %v235 = vsel %vm234, %v231, %v233
  %v236 = vsel %vm234, %v229, %v231
  %v237 = vsel %vm234, %v227, %v229
  %v238 = vsel %vm234, %v233, %v227
  %vm239 = vcmp.ge.s32.totalorder %v31, 32
  %vm240 = vcmp.ge.s32.totalorder %v32, 32
  %vm241 = vcmp.ge.s32.totalorder %v33, 32
  %vm242 = vcmp.ge.s32.totalorder %v34, 32
  %v243 = vsel %vm239, %v238, 0.0
  %v244 = vsel %vm240, %v237, 0.0
  %v245 = vsel %vm241, %v236, 0.0
  %v246 = vsel %vm242, %v235, 0.0
  %v251 = vcombine.low %v243, %v244
  %v252 = vcombine.low %v245, %v246
  %v255 = vadd.f32 %v218, %v251
  %v256 = vadd.f32 %v219, %v252
  %v259 = vcombine.high %v255, %v255
  %v260 = vcombine.high %v256, %v256
  %263 = vrot.lane.b32.xlu0 %v255, 64
  %v264 = vpop.permute.xlu0 %263
  %265 = vrot.lane.b32.xlu0 %v259, 64
  %v266 = vpop.permute.xlu0 %265
  %267 = vrot.lane.b32.xlu0 %v256, 64
  %v268 = vpop.permute.xlu0 %267
  %269 = vrot.lane.b32.xlu0 %v260, 64
  %v270 = vpop.permute.xlu0 %269
  %vm271 = vcmp.lt.s32.totalorder %v31, 64
  %v272 = vsel %vm271, %v268, %v270
  %v273 = vsel %vm271, %v266, %v268
  %v274 = vsel %vm271, %v264, %v266
  %v275 = vsel %vm271, %v270, %v264
  %vm276 = vcmp.ge.s32.totalorder %v31, 64
  %vm277 = vcmp.ge.s32.totalorder %v32, 64
  %vm278 = vcmp.ge.s32.totalorder %v33, 64
  %vm279 = vcmp.ge.s32.totalorder %v34, 64
  %v280 = vsel %vm276, %v275, 0.0
  %v281 = vsel %vm277, %v274, 0.0
  %v282 = vsel %vm278, %v273, 0.0
  %v283 = vsel %vm279, %v272, 0.0
  %v288 = vcombine.low %v280, %v281
  %v289 = vcombine.low %v282, %v283
  %v292 = vadd.f32 %v255, %v288
  %v293 = vadd.f32 %v256, %v289
  %v296 = vcombine.high %v292, %v292
  %v297 = vcombine.high %v293, %v293
  %vm300 = vcmp.ge.s32.totalorder %v31, 128
  %vm301 = vcmp.ge.s32.totalorder %v32, 128
  %vm302 = vcmp.ge.s32.totalorder %v33, 128
  %vm303 = vcmp.ge.s32.totalorder %v34, 128
  %v304 = vsel %vm300, %v297, 0.0
  %v305 = vsel %vm301, %v292, 0.0
  %v306 = vsel %vm302, %v296, 0.0
  %v307 = vsel %vm303, %v293, 0.0
  %v312 = vcombine.low %v304, %v305
  %v313 = vcombine.low %v306, %v307
  %v316 = vadd.f32 %v292, %v312
  %v317 = vadd.f32 %v293, %v313
  %v320 = vcombine.high %v316, %v316
  %v321 = vcombine.high %v317, %v317
  %vm324 = vcmp.ge.s32.totalorder %v31, 256
  %vm325 = vcmp.ge.s32.totalorder %v32, 256
  %vm326 = vcmp.ge.s32.totalorder %v33, 256
  %vm327 = vcmp.ge.s32.totalorder %v34, 256
  %v328 = vsel %vm324, %v317, 0.0
  %v329 = vsel %vm325, %v321, 0.0
  %v330 = vsel %vm326, %v316, 0.0
  %v331 = vsel %vm327, %v320, 0.0
  %v336 = vcombine.low %v328, %v329
  %v337 = vcombine.low %v330, %v331
  %v340 = vadd.f32 %v316, %v336
  %v341 = vadd.f32 %v317, %v337
  %v342 = vld [vmem:[#allocation2] sm:$0xf]
  %344 = vset.pattern.permute.xlu0 0
  %345 = vperm.xlu0 %344, %v342
  %v346 = vpop.permute.xlu0 %345
  %v348 = vunpack.c.l.s4 839922192
  %v349 = vunpack.c.0.s8 %v348
  %v350 = vlaneseq
  %v351 = vshrl.u32 %v350, 7
  %v352 = vsub.s32 %v349, %v351
  %v353 = vrot.slane %v346, %v352
  %v355 = vadd.f32 %v340, %v353
  %v356 = vadd.f32 %v341, %v353
  %v357 = vadd.s32 %v31, 1
  %v358 = vadd.s32 %v32, 1
  %v359 = vadd.s32 %v33, 1
  %v360 = vadd.s32 %v34, 1
  %s361 = smul.u32 0, 512
  %v362 = vstv %s361
  %v363 = vadd.s32 %v357, %v362
  %v364 = vadd.s32 %v358, %v362
  %v365 = vadd.s32 %v359, %v362
  %v366 = vadd.s32 %v360, %v362
  %v367 = vcvt.s32.f32 %v363
  %v368 = vcvt.s32.f32 %v364
  %v369 = vcvt.s32.f32 %v365
  %v370 = vcvt.s32.f32 %v366
  %v373 = vcombine.high %v355, %v355
  %v374 = vcombine.high %v356, %v356
  %v377 = vsub.f32 %v367, %v355
  %v378 = vsub.f32 %v368, %v373
  %v379 = vsub.f32 %v369, %v356
  %v380 = vsub.f32 %v370, %v374
  %382 = vset.pattern.permute.xlu0 0
  %383 = vperm.xlu0 %382, %v29
  %v384 = vpop.permute.xlu0 %383
  %v386 = vsub.f32 %v384, %v355
  %v387 = vsub.f32 %v384, %v373
  %v388 = vsub.f32 %v384, %v356
  %v389 = vsub.f32 %v384, %v374
  %v390 = vadd.f32 %v384, %v377
  %v391 = vadd.f32 %v384, %v378
  %v392 = vadd.f32 %v384, %v379
  %v393 = vadd.f32 %v384, %v380
  %v394 = vrcp.pop %v390
  %v395 = vmul.f32 %v386, %v394
  %v396 = vrcp.pop %v391
  %v397 = vmul.f32 %v387, %v396
  %v398 = vrcp.pop %v392
  %v399 = vmul.f32 %v388, %v398
  %v400 = vrcp.pop %v393
  %v401 = vmul.f32 %v389, %v400
  %v402 = vsub.f32 1.0, %v395
  %v403 = vsub.f32 1.0, %v397
  %v404 = vsub.f32 1.0, %v399
  %v405 = vsub.f32 1.0, %v401
  %406 = vrot.lane.b32.xlu0 %v402, 1
  %v407 = vpop.permute.xlu0 %406
  %408 = vrot.lane.b32.xlu0 %v403, 1
  %v409 = vpop.permute.xlu0 %408
  %410 = vrot.lane.b32.xlu0 %v404, 1
  %v411 = vpop.permute.xlu0 %410
  %412 = vrot.lane.b32.xlu0 %v405, 1
  %v413 = vpop.permute.xlu0 %412
  %v414 = vsel %vm49, %v411, %v413
  %v415 = vsel %vm49, %v409, %v411
  %v416 = vsel %vm49, %v407, %v409
  %v417 = vsel %vm49, %v413, %v407
  %vm418 = vcmp.eq.s32.totalorder %v31, 0
  %vm419 = vcmp.eq.s32.totalorder %v32, 0
  %vm420 = vcmp.eq.s32.totalorder %v33, 0
  %vm421 = vcmp.eq.s32.totalorder %v34, 0
  %v422 = vld [vmem:[#allocation3] sm:$0xf]
  %424 = vset.pattern.permute.xlu0 0
  %425 = vperm.xlu0 %424, %v422
  %v426 = vpop.permute.xlu0 %425
  %v428 = vsel %vm418, %v426, %v417
  %v429 = vsel %vm419, %v426, %v416
  %v430 = vsel %vm420, %v426, %v415
  %v431 = vsel %vm421, %v426, %v414
  %v432 = vsub.f32 %v402, %v428
  %v433 = vsub.f32 %v403, %v429
  %v434 = vsub.f32 %v404, %v430
  %v435 = vsub.f32 %v405, %v431
  %v436 = vld [vmem:[%s3] sm:$0xf]
  %v441 = vcombine.low %v432, %v433
  %v442 = vcombine.low %v434, %v435
  %v445 = vmul.f32 %v24, %v441
  %v446 = vmul.f32 %v25, %v442
  %v449 = vcombine.high %v445, %v445
  %v450 = vcombine.high %v446, %v446
  %vm453 = vcmask 1043456
  %v454 = vsel %vm453, %v445, 0.0
  %v455 = vsel %vm453, %v449, 0.0
  %v456 = vadd.f32 %v454, %v455
  %v457 = vsel %vm453, %v446, 0.0
  %v458 = vadd.f32 %v456, %v457
  %v459 = vsel %vm453, %v450, 0.0
  %v460 = vadd.f32 %v458, %v459
  %461 = vadd.xlane.f32.xlu0 %v460
  %v462 = vpop.xlane.xlu0 %461
  %v463 = vadd.f32 %v436, %v462
  %vm464 = vcmask 3072
  %465 = vst.msk [vmem:[%s3] sm:$0xf] %vm464, %v463
  %v466 = vld [vmem:[#allocation2] sm:$0xf]
  %v467 = vsel %vm453, %v27, 0.0
  %v468 = vsel %vm453, %v37, 0.0
  %v469 = vadd.f32 %v467, %v468
  %v470 = vsel %vm453, %v28, 0.0
  %v471 = vadd.f32 %v469, %v470
  %v472 = vsel %vm453, %v38, 0.0
  %v473 = vadd.f32 %v471, %v472
  %474 = vadd.xlane.f32.xlu0 %v473
  %v475 = vpop.xlane.xlu0 %474
  %v476 = vadd.f32 %v466, %v475
  %477 = vst.msk [vmem:[#allocation2] sm:$0xf] %vm464, %v476
  %479 = vrot.lane.b32.xlu0 %v405, 1
  %v480 = vpop.permute.xlu0 %479
  %482 = vst.msk [vmem:[#allocation3] sm:$0xf] %vm464, %v480
  // Predicated region
  $region18: #{lovasz_softmax_loss.3} parent=0 // pred_check
    _
  $region19: #{lovasz_softmax_loss.3} parent=0 // pred_check_branch
    %484 = sbr.rel (0) target = $region21
  $region20: #{lovasz_softmax_loss.3} parent=0 // pred_region
    _
  $region21: #{lovasz_softmax_loss.3} parent=0 // pred_fallthru
    _
  // Predicated region
  $region22: #{lovasz_softmax_loss.3} parent=0 // pred_check
    _
  $region23: #{lovasz_softmax_loss.3} parent=0 // pred_check_branch
    %486 = sbr.rel (0) target = $region25
  $region24: #{lovasz_softmax_loss.3} parent=0 // pred_region
    _
  $region25: #{lovasz_softmax_loss.3} parent=0 // pred_fallthru
    _

</llo_original>
